<compile_context>
chip_gen: v7x
topology: tpu7x:2x2x1
jax: 0.10.0
libtpu: 0.0.40
codegen_flags: <defaults>
</compile_context>

<pallas_src>
import math
import functools

import jax
import jax.numpy as jnp
from jax.experimental import pallas as pl
from jax.experimental.pallas import tpu as pltpu


_NEG_BIG = -1e30  # finite "-inf" so online-softmax corrections never make NaN


def _round_up(x, m):
    return ((x + m - 1) // m) * m


def _vmem_capacity_bytes():
    try:
        info = pltpu.get_tpu_info()
        cap = getattr(info, "vmem_capacity_bytes", None)
        if cap:
            return int(cap)
    except Exception:
        pass
    return 64 * 1024 * 1024  # conservative: v7x per-TensorCore VMEM


def _pick_tiles(A, N, D_pad, itemsize, block_a, block_n, vmem_cap):
    """Tile sizes sized against a VMEM footprint model; >=2 anchor tiles when possible."""
    sub = max(8, 32 // itemsize)  # sublane packing: f32 -> 8, bf16 -> 16, 1B -> 32
    tA = min(_round_up(block_a, sub), _round_up(A, sub))
    tN = min(_round_up(block_n, 128), _round_up(N, 128))
    # v7x has 2 TensorCores: keep the parallel (anchor) axis >= 2 tiles when possible.
    if _round_up(A, sub) > sub and _round_up(A, tA) // tA < 2:
        tA = min(tA, _round_up(-(-A // 2), sub))

    def footprint(ta, tn):
        feats = 2 * (ta + tn) * D_pad * itemsize      # double-buffered feature blocks
        ids = 2 * (ta * 128 + 8 * tn) * 4             # lane/sublane-padded id blocks
        small = (2 + 2 + 3) * ta * 128 * 4            # s0 input, output, 3 scratch cols
        temps = 10 * ta * tn * 4                      # compiler-managed f32 temporaries
        return feats + ids + small + temps

    budget = int(0.70 * vmem_cap)
    while footprint(tA, tN) > budget and tN > 128:
        tN = max(128, tN // 2)
    while footprint(tA, tN) > budget and tA > sub:
        tA = max(sub, tA // 2)
    return tA, tN, footprint(tA, tN)


def _supcon_kernel(aid_ref, cid_ref, s0_ref, anchor_ref, contrast_ref, out_ref,
                   m_sc, l_sc, s1_sc,
                   *, inv_t_pos, c_cos, c_sin, n_valid, has_padding):
    i = pl.program_id(0)          # anchor-row tile (parallel)
    j = pl.program_id(1)          # contrast-column tile (reduction, last)

    @pl.when(j == 0)
    def _init():
        m_sc[...] = jnp.full_like(m_sc, _NEG_BIG)
        l_sc[...] = jnp.zeros_like(l_sc)
        s1_sc[...] = jnp.zeros_like(s1_sc)

    a = anchor_ref[...]           # [tA, Dp]
    c = contrast_ref[...]         # [tN, Dp]
    # sim[a, n] = <anchor_a, contrast_n>; last-dim contraction -> MXU, f32 accum.
    sim = jax.lax.dot_general(
        a, c, dimension_numbers=(((1,), (1,)), ((), ())),
        preferred_element_type=jnp.float32)                  # [tA, tN] f32

    tA = a.shape[0]
    tN = c.shape[0]

    # Dual-temperature logits. inv_t_neg is folded into c_cos / c_sin:
    #   cos(acos(s) - m) / t_neg == s*(cos(m)/t_neg) + sqrt(1-s^2)*(sin(m)/t_neg)
    logits_pos = sim * inv_t_pos
    s = jnp.clip(sim, -1.0 + 1e-8, 1.0 - 1e-8)
    logits_neg = s * c_cos + jnp.sqrt(jnp.maximum(1.0 - s * s, 0.0)) * c_sin

    # Masks rebuilt in-kernel from tiny id vectors + rank-1 iotas
    # (no [tA,tN] int32 temporaries, no HBM mask traffic).
    aid = aid_ref[...]                                        # [tA, 1] int32
    cid = cid_ref[...]                                        # [1, tN] int32
    same = aid == cid                                         # positive-pair mask (incl. self)
    row = i * tA + jax.lax.broadcasted_iota(jnp.int32, (tA, 1), 0)
    col = j * tN + jax.lax.broadcasted_iota(jnp.int32, (1, tN), 1)
    exp_mask = row != col                                     # logits_mask (zero diagonal)
    if has_padding:
        exp_mask = jnp.logical_and(exp_mask, col < n_valid)   # drop padded columns
    pos_mask = jnp.logical_and(same, exp_mask)                # boolean, never converted

    # adc = logits_neg + mask*(logits_pos - logits_neg); mask is exactly 0/1.
    adc = jnp.where(same, logits_pos, logits_neg)
    adc_m = jnp.where(exp_mask, adc, _NEG_BIG)

    # Flash-style online logsumexp over non-self, non-padded columns.
    m_prev = m_sc[...]
    m_new = jnp.maximum(m_prev, jnp.max(adc_m, axis=1, keepdims=True))
    alpha = jnp.exp(m_prev - m_new)
    p = jnp.exp(adc_m - m_new)            # masked entries underflow to exactly 0
    l_sc[...] = alpha * l_sc[...] + jnp.sum(p, axis=1, keepdims=True)
    m_sc[...] = m_new

    # Positive-pair logit sum (count S0 comes from the wrapper).
    s1_sc[...] += jnp.sum(jnp.where(pos_mask, adc_m, 0.0), axis=1, keepdims=True)

    @pl.when(j == pl.num_programs(1) - 1)
    def _finalize():
        lse = m_sc[...] + jnp.log(l_sc[...])
        # -mean_log_prob_pos = LSE - S1/S0  (row-max of the reference cancels).
        # NOTE: rows with zero positives give NaN, matching the PyTorch reference.
        out_ref[...] = lse - s1_sc[...] / s0_ref[...]


def _dense_mask_reference(anchor_feature, contrast_feature, mask,
                          anchor_count, contrast_count,
                          temperature_pos, pos_neg_ratio):
    """Plain-JAX transcription of the PyTorch forward (fallback & check)."""
    t_pos = float(temperature_pos)
    t_neg = t_pos / float(pos_neg_ratio)
    anchor_feature = anchor_feature.astype(jnp.float32)
    contrast_feature = contrast_feature.astype(jnp.float32)
    mask = jnp.tile(mask.astype(jnp.float32), (anchor_count, contrast_count))

    sim = anchor_feature @ contrast_feature.T
    adc_pos = sim / t_pos
    eps = 1e-8
    m = ((1.0 / math.sqrt(t_neg)) - 1.0) * math.pi
    m = m % math.pi
    theta = jnp.arccos(jnp.clip(sim, -1.0 + eps, 1.0 - eps)) - m
    adc_neg = jnp.cos(theta) / t_neg
    adc = adc_neg + mask * (adc_pos - adc_neg)
    logits = adc - jnp.max(adc, axis=1, keepdims=True)
    A = anchor_feature.shape[0]
    N = contrast_feature.shape[0]
    logits_mask = 1.0 - jnp.eye(A, N, dtype=jnp.float32)
    mask = mask * logits_mask
    exp_logits = jnp.exp(logits) * logits_mask
    log_prob = logits - jnp.log(jnp.sum(exp_logits, axis=1, keepdims=True))
    mean_log_prob_pos = jnp.sum(mask * log_prob, axis=1) / jnp.sum(mask, axis=1)
    return -jnp.mean(mean_log_prob_pos)


def supcon_loss_dual_ttheta(features, labels=None, mask=None,
                            temperature_pos=0.07, contrast_mode='all',
                            pos_neg_ratio=10,
                            block_a=512, block_n=1024,
                            mxu_dtype=jnp.bfloat16):
    """JAX/Pallas equivalent of SupConLossDualTtheta.forward."""
    if features.ndim < 3:
        raise ValueError('`features` needs to be [bsz, n_views, ...]')
    if features.ndim > 3:
        features = features.reshape(features.shape[0], features.shape[1], -1)

    bsz, n_views, _ = features.shape

    if labels is not None and mask is not None:
        raise ValueError('Cannot define both `labels` and `mask`')

    contrast_count = n_views
    # torch.cat(torch.unbind(features, dim=1), dim=0): view-major stacking
    contrast_feature = jnp.concatenate(
        [features[:, v] for v in range(n_views)], axis=0)

    if contrast_mode == 'one':
        anchor_feature = features[:, 0]
        anchor_count = 1
    elif contrast_mode == 'all':
        anchor_feature = contrast_feature
        anchor_count = contrast_count
    else:
        raise ValueError('Unknown mode: {}'.format(contrast_mode))

    if mask is not None:
        # TODO(synk): arbitrary (possibly asymmetric) user-supplied dense masks
        # are not routed through the Pallas kernel; they use the plain-JAX path.
        return _dense_mask_reference(anchor_feature, contrast_feature,
                                     jnp.asarray(mask, jnp.float32),
                                     anchor_count, contrast_count,
                                     temperature_pos, pos_neg_ratio)

    if labels is None:
        ids = jnp.arange(bsz, dtype=jnp.int32)         # eye mask == SimCLR
    else:
        labels = jnp.asarray(labels).reshape(-1)
        if labels.shape[0] != bsz:
            raise ValueError('Num of labels does not match num of features')
        ids = labels.astype(jnp.int32)

    anchor_ids = jnp.tile(ids, anchor_count)            # [A] int32
    contrast_ids = jnp.tile(ids, contrast_count)        # [N] int32

    # Per-anchor positive count S0, computed in the wrapper (excludes self):
    #   (# samples with same label) * contrast_count - 1
    same_counts = jnp.sum(ids[None, :] == ids[:, None], axis=1).astype(jnp.float32)
    s0 = jnp.tile(same_counts * float(contrast_count) - 1.0, anchor_count)  # [A]

    t_pos = float(temperature_pos)
    t_neg = t_pos / float(pos_neg_ratio)
    margin = ((1.0 / math.sqrt(t_neg)) - 1.0) * math.pi
    margin = margin % math.pi

    A, D = anchor_feature.shape
    N = contrast_feature.shape[0]

    itemsize = jnp.dtype(mxu_dtype).itemsize
    D_pad = _round_up(D, 128)
    vmem_cap = _vmem_capacity_bytes()
    tA, tN, foot = _pick_tiles(A, N, D_pad, itemsize, block_a, block_n, vmem_cap)
    A_pad = _round_up(A, tA)
    N_pad = _round_up(N, tN)
    has_padding = N_pad != N

    def pad2(x, rows, cols, dtype):
        x = x.astype(dtype)
        return jnp.pad(x, ((0, rows - x.shape[0]), (0, cols - x.shape[1])))

    anchor_p = pad2(anchor_feature, A_pad, D_pad, mxu_dtype)
    contrast_p = pad2(contrast_feature, N_pad, D_pad, mxu_dtype)
    aid_p = jnp.pad(anchor_ids, (0, A_pad - A),
                    constant_values=-1).reshape(A_pad, 1)
    cid_p = jnp.pad(contrast_ids, (0, N_pad - N),
                    constant_values=-1).reshape(1, N_pad)
    s0_p = jnp.pad(s0, (0, A_pad - A), constant_values=1.0).reshape(A_pad, 1)

    kernel = functools.partial(
        _supcon_kernel,
        inv_t_pos=1.0 / t_pos,
        c_cos=math.cos(margin) / t_neg,     # inv_t_neg folded in
        c_sin=math.sin(margin) / t_neg,
        n_valid=N,
        has_padding=has_padding)

    num_i = A_pad // tA
    cost = pl.CostEstimate(
        flops=2 * A_pad * N_pad * D_pad,
        transcendentals=2 * A_pad * N_pad,
        bytes_accessed=int(A_pad * D_pad * itemsize            # anchors: once
                           + num_i * N_pad * D_pad * itemsize  # contrast: re-streamed per i
                           + num_i * N_pad * 4                 # contrast ids per i
                           + A_pad * 4 * 3))                   # aid, s0, out

    vmem_limit = int(min(0.9 * vmem_cap, max(48 * 1024 * 1024, 1.5 * foot)))

    out = pl.pallas_call(
        kernel,
        out_shape=jax.ShapeDtypeStruct((A_pad, 1), jnp.float32),
        grid_spec=pltpu.PrefetchScalarGridSpec(
            num_scalar_prefetch=0,
            grid=(A_pad // tA, N_pad // tN),
            in_specs=[
                pl.BlockSpec((tA, 1), lambda i, j: (i, 0)),       # anchor ids
                pl.BlockSpec((1, tN), lambda i, j: (0, j)),       # contrast ids
                pl.BlockSpec((tA, 1), lambda i, j: (i, 0)),       # positive counts S0
                pl.BlockSpec((tA, D_pad), lambda i, j: (i, 0)),   # anchor feats
                pl.BlockSpec((tN, D_pad), lambda i, j: (j, 0)),   # contrast feats
            ],
            out_specs=pl.BlockSpec((tA, 1), lambda i, j: (i, 0)),
            scratch_shapes=[pltpu.VMEM((tA, 1), jnp.float32)] * 3,  # m, l, s1
        ),
        compiler_params=pltpu.CompilerParams(
            dimension_semantics=("parallel", "arbitrary"),
            vmem_limit_bytes=vmem_limit),
        cost_estimate=cost,
    )(aid_p, cid_p, s0_p, anchor_p, contrast_p)

    # out[a, 0] = -mean_log_prob_pos[a]; mean over the A valid anchors equals
    # the reference loss.view(anchor_count, bsz).mean().
    return jnp.mean(out[:A, 0])


if __name__ == "__main__":
    key = jax.random.PRNGKey(0)
    bsz, n_views, dim = 8, 2, 32

    kf, _ = jax.random.split(key)
    features = jax.random.normal(kf, (bsz, n_views, dim), dtype=jnp.float32)
    # L2-normalize along the feature dim (SupCon expects unit-norm embeddings)
    features = features / jnp.linalg.norm(features, axis=-1, keepdims=True)

    labels = jnp.array([0, 1, 2, 3, 0, 1, 2, 3], dtype=jnp.int32)

    # f32-MXU run, checked against a plain-JAX transcription of the reference.
    loss_f32 = supcon_loss_dual_ttheta(features, labels=labels,
                                       temperature_pos=0.07,
                                       contrast_mode='all',
                                       pos_neg_ratio=10,
                                       mxu_dtype=jnp.float32)
    loss_f32 = jax.block_until_ready(loss_f32)

    mask_ref = (labels[:, None] == labels[None, :]).astype(jnp.float32)
    contrast_feat = jnp.concatenate(
        [features[:, v] for v in range(n_views)], axis=0)
    ref = _dense_mask_reference(contrast_feat, contrast_feat, mask_ref,
                                n_views, n_views, 0.07, 10)
    assert jnp.allclose(loss_f32, ref, rtol=2e-3, atol=2e-3), (loss_f32, ref)

    # Default bf16-MXU run (fast path on v6e/v7x, f32 accumulation in-kernel).
    # TODO(synk): optional bf16 element-wise margin path (v6e/v7x only) not enabled.
    loss_bf16 = supcon_loss_dual_ttheta(features, labels=labels,
                                        temperature_pos=0.07,
                                        contrast_mode='all',
                                        pos_neg_ratio=10)
    loss_bf16 = jax.block_until_ready(loss_bf16)

    assert loss_f32.shape == () and jnp.isfinite(loss_f32)
    assert loss_bf16.shape == () and jnp.isfinite(loss_bf16)
    print("KERNEL_OK")
</pallas_src>

<mosaic_0001>
module attributes {stable_mosaic.version = 11 : i64} {
  func.func @_supcon_kernel(%arg0: i32, %arg1: i32, %arg2: memref<8x1xi32, #tpu.memory_space<vmem>>, %arg3: memref<1x128xi32, #tpu.memory_space<vmem>>, %arg4: memref<8x1xf32, #tpu.memory_space<vmem>>, %arg5: memref<8x128xf32, #tpu.memory_space<vmem>>, %arg6: memref<128x128xf32, #tpu.memory_space<vmem>>, %arg7: memref<8x1xf32, #tpu.memory_space<vmem>>, %arg8: memref<8x1xf32, #tpu.memory_space<vmem>>, %arg9: memref<8x1xf32, #tpu.memory_space<vmem>>, %arg10: memref<8x1xf32, #tpu.memory_space<vmem>>) attributes {dimension_semantics = [#tpu.dimension_semantics<parallel>, #tpu.dimension_semantics<arbitrary>], iteration_bounds = array<i64: 2, 1>, scalar_prefetch = 0 : i64, scratch_operands = 3 : i64, tpu.core_type = #tpu.core_type<tc>, window_params = [{transform_indices = @transform_0, window_bounds = array<i64: 8, 1>}, {transform_indices = @transform_1, window_bounds = array<i64: 1, 128>}, {transform_indices = @transform_2, window_bounds = array<i64: 8, 1>}, {transform_indices = @transform_3, window_bounds = array<i64: 8, 128>}, {transform_indices = @transform_4, window_bounds = array<i64: 128, 128>}, {transform_indices = @transform_5, window_bounds = array<i64: 8, 1>}]} {
    %c0_i32 = arith.constant 0 : i32
    %0 = arith.cmpi eq, %arg1, %c0_i32 : i32
    %1 = arith.extui %0 : i1 to i32
    %c0_i32_0 = arith.constant 0 : i32
    %2 = arith.cmpi ne, %1, %c0_i32_0 : i32
    scf.if %2 {
      %cst_34 = arith.constant -1.000000e+30 : f32
      %73 = vector.broadcast %cst_34 : f32 to vector<8x1xf32>
      %c0_35 = arith.constant 0 : index
      %c0_36 = arith.constant 0 : index
      %74 = vector.load %arg8[%c0_35, %c0_36] : memref<8x1xf32, #tpu.memory_space<vmem>>, vector<8x1xf32>
      tpu.vector_store %arg8[%c0_35, %c0_36], %73 {strides = array<i32>} : memref<8x1xf32, #tpu.memory_space<vmem>>, vector<8x1xf32>,
      %cst_37 = arith.constant 0.000000e+00 : f32
      %75 = vector.broadcast %cst_37 : f32 to vector<8x1xf32>
      %c0_38 = arith.constant 0 : index
      %c0_39 = arith.constant 0 : index
      %76 = vector.load %arg9[%c0_38, %c0_39] : memref<8x1xf32, #tpu.memory_space<vmem>>, vector<8x1xf32>
      tpu.vector_store %arg9[%c0_38, %c0_39], %75 {strides = array<i32>} : memref<8x1xf32, #tpu.memory_space<vmem>>, vector<8x1xf32>,
      %cst_40 = arith.constant 0.000000e+00 : f32
      %77 = vector.broadcast %cst_40 : f32 to vector<8x1xf32>
      %c0_41 = arith.constant 0 : index
      %c0_42 = arith.constant 0 : index
      %78 = vector.load %arg10[%c0_41, %c0_42] : memref<8x1xf32, #tpu.memory_space<vmem>>, vector<8x1xf32>
      tpu.vector_store %arg10[%c0_41, %c0_42], %77 {strides = array<i32>} : memref<8x1xf32, #tpu.memory_space<vmem>>, vector<8x1xf32>,
    } else {
    }
    %c0 = arith.constant 0 : index
    %c0_1 = arith.constant 0 : index
    %3 = vector.load %arg5[%c0, %c0_1] : memref<8x128xf32, #tpu.memory_space<vmem>>, vector<8x128xf32>
    %c0_2 = arith.constant 0 : index
    %c0_3 = arith.constant 0 : index
    %4 = vector.load %arg6[%c0_2, %c0_3] : memref<128x128xf32, #tpu.memory_space<vmem>>, vector<128x128xf32>
    %cst = arith.constant dense<0.000000e+00> : vector<8x128xf32>
    %5 = tpu.matmul %3, %4, %cst {dimension_numbers = #tpu.dot_dimension_numbers<[1], [1], [0], [0], [0, 0, 1, 0], [], []>} : vector<8x128xf32>, vector<128x128xf32>, vector<8x128xf32> -> vector<8x128xf32>
    %cst_4 = arith.constant 14.2857141 : f32
    %6 = vector.broadcast %cst_4 : f32 to vector<8x128xf32>
    %7 = arith.mulf %5, %6 : vector<8x128xf32>
    %cst_5 = arith.constant -1.000000e+00 : f32
    %cst_6 = arith.constant 1.000000e+00 : f32
    %8 = vector.broadcast %cst_5 : f32 to vector<8x128xf32>
    %9 = arith.maximumf %8, %5 : vector<8x128xf32>
    %10 = vector.broadcast %cst_6 : f32 to vector<8x128xf32>
    %11 = arith.minimumf %10, %9 : vector<8x128xf32>
    %cst_7 = arith.constant -141.255188 : f32
    %12 = vector.broadcast %cst_7 : f32 to vector<8x128xf32>
    %13 = arith.mulf %11, %12 : vector<8x128xf32>
    %14 = arith.mulf %11, %11 : vector<8x128xf32>
    %cst_8 = arith.constant 1.000000e+00 : f32
    %15 = vector.broadcast %cst_8 : f32 to vector<8x128xf32>
    %16 = arith.subf %15, %14 : vector<8x128xf32>
    %cst_9 = arith.constant 0.000000e+00 : f32
    %17 = vector.broadcast %cst_9 : f32 to vector<8x128xf32>
    %18 = arith.maximumf %16, %17 : vector<8x128xf32>
    %19 = math.sqrt %18 : vector<8x128xf32>
    %cst_10 = arith.constant 21.333849 : f32
    %20 = vector.broadcast %cst_10 : f32 to vector<8x128xf32>
    %21 = arith.mulf %19, %20 : vector<8x128xf32>
    %22 = arith.addf %13, %21 : vector<8x128xf32>
    %c0_11 = arith.constant 0 : index
    %c0_12 = arith.constant 0 : index
    %23 = vector.load %arg2[%c0_11, %c0_12] : memref<8x1xi32, #tpu.memory_space<vmem>>, vector<8x1xi32>
    %c0_13 = arith.constant 0 : index
    %c0_14 = arith.constant 0 : index
    %24 = vector.load %arg3[%c0_13, %c0_14] : memref<1x128xi32, #tpu.memory_space<vmem>>, vector<1x128xi32>
    %25 = vector.broadcast %23 : vector<8x1xi32> to vector<8x128xi32>
    %26 = vector.broadcast %24 : vector<1x128xi32> to vector<8x128xi32>
    %27 = arith.cmpi eq, %25, %26 : vector<8x128xi32>
    %c8_i32 = arith.constant 8 : i32
    %28 = arith.muli %arg0, %c8_i32 : i32
    %29 = tpu.iota {dimensions = array<i32: 0>} : vector<8x1xi32>
    %30 = vector.broadcast %28 : i32 to vector<8x1xi32>
    %31 = arith.addi %30, %29 : vector<8x1xi32>
    %c128_i32 = arith.constant 128 : i32
    %32 = arith.muli %arg1, %c128_i32 : i32
    %33 = tpu.iota {dimensions = array<i32: 1>} : vector<1x128xi32>
    %34 = vector.broadcast %32 : i32 to vector<1x128xi32>
    %35 = arith.addi %34, %33 : vector<1x128xi32>
    %36 = vector.broadcast %31 : vector<8x1xi32> to vector<8x128xi32>
    %37 = vector.broadcast %35 : vector<1x128xi32> to vector<8x128xi32>
    %38 = arith.cmpi ne, %36, %37 : vector<8x128xi32>
    %c16_i32 = arith.constant 16 : i32
    %39 = vector.broadcast %c16_i32 : i32 to vector<1x128xi32>
    %40 = arith.cmpi slt, %35, %39 : vector<1x128xi32>
    %41 = vector.broadcast %40 : vector<1x128xi1> to vector<8x128xi1>
    %42 = arith.andi %38, %41 : vector<8x128xi1>
    %43 = arith.andi %27, %42 : vector<8x128xi1>
    %44 = arith.select %27, %7, %22 : vector<8x128xi1>, vector<8x128xf32>
    %cst_15 = arith.constant -1.000000e+30 : f32
    %45 = vector.broadcast %cst_15 : f32 to vector<8x128xf32>
    %46 = arith.select %42, %44, %45 : vector<8x128xi1>, vector<8x128xf32>
    %c0_16 = arith.constant 0 : index
    %c0_17 = arith.constant 0 : index
    %47 = vector.load %arg8[%c0_16, %c0_17] : memref<8x1xf32, #tpu.memory_space<vmem>>, vector<8x1xf32>
    %cst_18 = arith.constant dense<0xFF800000> : vector<8xf32>
    %48 = vector.multi_reduction <maximumf>, %46, %cst_18 [1] : vector<8x128xf32> to vector<8xf32>
    %49 = vector.shape_cast %48 : vector<8xf32> to vector<8x1xf32>
    %50 = arith.maximumf %47, %49 : vector<8x1xf32>
    %51 = arith.subf %47, %50 : vector<8x1xf32>
    %52 = math.exp %51 : vector<8x1xf32>
    %53 = vector.broadcast %50 : vector<8x1xf32> to vector<8x128xf32>
    %54 = arith.subf %46, %53 : vector<8x128xf32>
    %55 = math.exp %54 : vector<8x128xf32>
    %c0_19 = arith.constant 0 : index
    %c0_20 = arith.constant 0 : index
    %56 = vector.load %arg9[%c0_19, %c0_20] : memref<8x1xf32, #tpu.memory_space<vmem>>, vector<8x1xf32>
    %57 = arith.mulf %52, %56 : vector<8x1xf32>
    %cst_21 = arith.constant dense<0.000000e+00> : vector<8xf32>
    %58 = vector.multi_reduction <add>, %55, %cst_21 [1] : vector<8x128xf32> to vector<8xf32>
    %59 = vector.shape_cast %58 : vector<8xf32> to vector<8x1xf32>
    %60 = arith.addf %57, %59 : vector<8x1xf32>
    %c0_22 = arith.constant 0 : index
    %c0_23 = arith.constant 0 : index
    %61 = vector.load %arg9[%c0_22, %c0_23] : memref<8x1xf32, #tpu.memory_space<vmem>>, vector<8x1xf32>
    tpu.vector_store %arg9[%c0_22, %c0_23], %60 {strides = array<i32>} : memref<8x1xf32, #tpu.memory_space<vmem>>, vector<8x1xf32>,
    %c0_24 = arith.constant 0 : index
    %c0_25 = arith.constant 0 : index
    %62 = vector.load %arg8[%c0_24, %c0_25] : memref<8x1xf32, #tpu.memory_space<vmem>>, vector<8x1xf32>
    tpu.vector_store %arg8[%c0_24, %c0_25], %50 {strides = array<i32>} : memref<8x1xf32, #tpu.memory_space<vmem>>, vector<8x1xf32>,
    %c0_26 = arith.constant 0 : index
    %c0_27 = arith.constant 0 : index
    %63 = vector.load %arg10[%c0_26, %c0_27] : memref<8x1xf32, #tpu.memory_space<vmem>>, vector<8x1xf32>
    %cst_28 = arith.constant 0.000000e+00 : f32
    %64 = vector.broadcast %cst_28 : f32 to vector<8x128xf32>
    %65 = arith.select %43, %46, %64 : vector<8x128xi1>, vector<8x128xf32>
    %cst_29 = arith.constant dense<0.000000e+00> : vector<8xf32>
    %66 = vector.multi_reduction <add>, %65, %cst_29 [1] : vector<8x128xf32> to vector<8xf32>
    %67 = vector.shape_cast %66 : vector<8xf32> to vector<8x1xf32>
    %68 = arith.addf %63, %67 : vector<8x1xf32>
    %c0_30 = arith.constant 0 : index
    %c0_31 = arith.constant 0 : index
    %69 = vector.load %arg10[%c0_30, %c0_31] : memref<8x1xf32, #tpu.memory_space<vmem>>, vector<8x1xf32>
    tpu.vector_store %arg10[%c0_30, %c0_31], %68 {strides = array<i32>} : memref<8x1xf32, #tpu.memory_space<vmem>>, vector<8x1xf32>,
    %c0_i32_32 = arith.constant 0 : i32
    %70 = arith.cmpi eq, %arg1, %c0_i32_32 : i32
    %71 = arith.extui %70 : i1 to i32
    %c0_i32_33 = arith.constant 0 : i32
    %72 = arith.cmpi ne, %71, %c0_i32_33 : i32
    scf.if %72 {
      %c0_34 = arith.constant 0 : index
      %c0_35 = arith.constant 0 : index
      %73 = vector.load %arg8[%c0_34, %c0_35] : memref<8x1xf32, #tpu.memory_space<vmem>>, vector<8x1xf32>
      %c0_36 = arith.constant 0 : index
      %c0_37 = arith.constant 0 : index
      %74 = vector.load %arg9[%c0_36, %c0_37] : memref<8x1xf32, #tpu.memory_space<vmem>>, vector<8x1xf32>
      %75 = math.log %74 : vector<8x1xf32>
      %76 = arith.addf %73, %75 : vector<8x1xf32>
      %c0_38 = arith.constant 0 : index
      %c0_39 = arith.constant 0 : index
      %77 = vector.load %arg10[%c0_38, %c0_39] : memref<8x1xf32, #tpu.memory_space<vmem>>, vector<8x1xf32>
      %c0_40 = arith.constant 0 : index
      %c0_41 = arith.constant 0 : index
      %78 = vector.load %arg4[%c0_40, %c0_41] : memref<8x1xf32, #tpu.memory_space<vmem>>, vector<8x1xf32>
      %79 = arith.divf %77, %78 : vector<8x1xf32>
      %80 = arith.subf %76, %79 : vector<8x1xf32>
      %c0_42 = arith.constant 0 : index
      %c0_43 = arith.constant 0 : index
      %81 = vector.load %arg7[%c0_42, %c0_43] : memref<8x1xf32, #tpu.memory_space<vmem>>, vector<8x1xf32>
      tpu.vector_store %arg7[%c0_42, %c0_43], %80 {strides = array<i32>} : memref<8x1xf32, #tpu.memory_space<vmem>>, vector<8x1xf32>,
    } else {
    }
    return
  }
  func.func @transform_0(%arg0: i32, %arg1: i32) -> (i32, i32) {
    %c0_i32 = arith.constant 0 : i32
    %c0_i32_0 = arith.constant 0 : i32
    return %arg0, %c0_i32 : i32, i32
  }
  func.func @transform_1(%arg0: i32, %arg1: i32) -> (i32, i32) {
    %c0_i32 = arith.constant 0 : i32
    %c0_i32_0 = arith.constant 0 : i32
    return %c0_i32, %arg1 : i32, i32
  }
  func.func @transform_2(%arg0: i32, %arg1: i32) -> (i32, i32) {
    %c0_i32 = arith.constant 0 : i32
    %c0_i32_0 = arith.constant 0 : i32
    return %arg0, %c0_i32 : i32, i32
  }
  func.func @transform_3(%arg0: i32, %arg1: i32) -> (i32, i32) {
    %c0_i32 = arith.constant 0 : i32
    %c0_i32_0 = arith.constant 0 : i32
    return %arg0, %c0_i32 : i32, i32
  }
  func.func @transform_4(%arg0: i32, %arg1: i32) -> (i32, i32) {
    %c0_i32 = arith.constant 0 : i32
    %c0_i32_0 = arith.constant 0 : i32
    return %arg1, %c0_i32 : i32, i32
  }
  func.func @transform_5(%arg0: i32, %arg1: i32) -> (i32, i32) {
    %c0_i32 = arith.constant 0 : i32
    %c0_i32_0 = arith.constant 0 : i32
    return %arg0, %c0_i32 : i32, i32
  }
}

</mosaic_0001>

<llo_original>
// kernel: tpu_custom_call.1
$region0: #{tpu_custom_call.1}
  #allocation0 [shape = 'u32[]', space=smem, size = 0x4, offset = 0x4, fixed_abs, tag = 'smem constant byte address 0x4 - core index']
  #allocation1 [shape = 'u32[144,128]{1,0:T(1,128)}', space=vmem, size = 0x12000, scoped, tag = 'internal scratch']
  #allocation2 [shape = 'f32[8,1]{1,0:T(8,128)}', space=vmem, size = 0x1000, scoped, tag = 'scratch operand']
  #allocation3 [shape = 'f32[8,1]{1,0:T(8,128)}', space=vmem, size = 0x1000, scoped, tag = 'scratch operand']
  #allocation4 [shape = 'f32[8,1]{1,0:T(8,128)}', space=vmem, size = 0x1000, scoped, tag = 'scratch operand']
  %s0 = inlined_call_operand.vmem [shape: s32[16,1], index: 0, kind: input, shape index: {}]
  %s1 = inlined_call_operand.vmem [shape: s32[1,128], index: 1, kind: input, shape index: {}]
  %s2 = inlined_call_operand.vmem [shape: f32[16,1], index: 2, kind: input, shape index: {}]
  %s3 = inlined_call_operand.vmem [shape: f32[16,128], index: 3, kind: input, shape index: {}]
  %s4 = inlined_call_operand.hbm [shape: f32[128,128], index: 4, kind: input, shape index: {}]
  %s5 = inlined_call_operand.vmem [shape: f32[16,1], index: 5, kind: output, shape index: {}]
  %s6 = sld [smem:[#allocation0]]
  $region65: #{tpu_custom_call.1} parent=0
    _
  %s8 = ssub.s32 1, %s6
  %s9 = scalar_select 0, %s8, %s6
  $region1: #{tpu_custom_call.1} parent=0
    #allocation5 [shape = 'u8[65536]{0}', space=vmem, size = 0x10000, scoped, tag = 'input window, operand 4, single buffered']
    #allocation6 [shape = 's32[2]{0}', space=sflag, size = 0x8, scoped, tag = 'scoped memory for tpu_custom_call.1']
    %10 = vsyncpa [#allocation6], 0
    loop: start=0, step=1, limit=4
    $region2: #{tpu_custom_call.1} parent=1 // loop_pre_header
      _
    $region3: #{tpu_custom_call.1} parent=1 // loop_header
      %s12 = sphi 0, %s16
      %p13 = scmp.ge.s32.totalorder %s12, 4
      %s19 = sphi 0, %s31
      %s20 = sphi 0, %s27
      %s21 = sphi 0, %s19
      %s22 = sphi 0, %s20
      %s23 = sphi 0, %s21
      %s24 = sphi 0, %s22
      %s34 = sphi 0, %s36
      %s37 = sphi 0, %s34
      %s38 = sphi 0, %s37
      %s54 = sphi 0, %s38
      %s60 = sphi 0, %s62
      %s63 = sphi 0, %s60
      %s64 = sphi 0, %s63
      %s80 = sphi 0, %s64
      %s86 = sphi 0, %s88
      %s89 = sphi 0, %s86
      %s90 = sphi 0, %s89
      %s106 = sphi 0, %s90
      %s112 = sphi 0, %s114
      %s115 = sphi 0, %s112
      %s116 = sphi 0, %s115
      %s132 = sphi 0, %s116
      %s138 = sphi 0, %s140
      %s141 = sphi 0, %s138
      %s142 = sphi 0, %s141
      %s158 = sphi 0, %s142
      %s164 = sphi 0, %s166
      %s167 = sphi 0, %s164
      %s168 = sphi 0, %s167
      %s184 = sphi 0, %s168
    $region4: #{tpu_custom_call.1} parent=1 // loop_header_branch
      %15 = sbr.rel (%p13) target = $region8
    $region5: #{tpu_custom_call.1} parent=1 // loop_body
      %s17 = ssub.s32 %s12, 1
      %s18 = ssub.s32 %s12, 2
      %s25 = sadd.s32 1, %s20
      %p26 = scmp.ge.s32.totalorder %s25, 1
      %s27 = scalar_select %p26, 0, %s25
      %s28 = sadd.s32 1, %s19
      %s29 = scalar_select %p26, %s28, %s19
      %p30 = scmp.ge.s32.totalorder %s29, 2
      %s31 = scalar_select %p30, 0, %s29
      %s32 = ssub.s32 %s19, %s31
      %p33 = scmp.eq.s32.totalorder %s32, 0
      %s35 = sadd.s32 %s34, 1
      %s36 = scalar_select %p33, %s34, %s35
      %p39 = pneg %p33
      %p40 = scmp.eq.s32.totalorder %s12, 1
      %p41 = por %p39, %p40
      %p42 = scmp.ne.s32.totalorder %s34, %s37
      %p43 = scmp.eq.s32.totalorder %s12, 0
      %p44 = por %p42, %p43
      %p45 = scmp.ne.s32.totalorder %s34, %s37
      %p46 = scmp.eq.s32.totalorder %s17, 1
      %p47 = por %p45, %p46
      %p48 = scmp.ne.s32.totalorder %s37, %s38
      %p49 = scmp.eq.s32.totalorder %s17, 0
      %p50 = por %p48, %p49
      %p51 = scmp.ne.s32.totalorder %s37, %s38
      %p52 = scmp.eq.s32.totalorder %s18, 1
      %p53 = por %p51, %p52
      %p55 = scmp.ne.s32.totalorder %s38, %s54
      %p56 = scmp.eq.s32.totalorder %s18, 0
      %p57 = por %p55, %p56
      %s58 = ssub.s32 %s20, %s27
      %p59 = scmp.eq.s32.totalorder %s58, 0
      %s61 = sadd.s32 %s60, 1
      %s62 = scalar_select %p59, %s60, %s61
      %p65 = pneg %p59
      %p66 = scmp.eq.s32.totalorder %s12, 1
      %p67 = por %p65, %p66
      %p68 = scmp.ne.s32.totalorder %s60, %s63
      %p69 = scmp.eq.s32.totalorder %s12, 0
      %p70 = por %p68, %p69
      %p71 = scmp.ne.s32.totalorder %s60, %s63
      %p72 = scmp.eq.s32.totalorder %s17, 1
      %p73 = por %p71, %p72
      %p74 = scmp.ne.s32.totalorder %s63, %s64
      %p75 = scmp.eq.s32.totalorder %s17, 0
      %p76 = por %p74, %p75
      %p77 = scmp.ne.s32.totalorder %s63, %s64
      %p78 = scmp.eq.s32.totalorder %s18, 1
      %p79 = por %p77, %p78
      %p81 = scmp.ne.s32.totalorder %s64, %s80
      %p82 = scmp.eq.s32.totalorder %s18, 0
      %p83 = por %p81, %p82
      %s84 = ssub.s32 %s19, %s31
      %p85 = scmp.eq.s32.totalorder %s84, 0
      %s87 = sadd.s32 %s86, 1
      %s88 = scalar_select %p85, %s86, %s87
      %p91 = pneg %p85
      %p92 = scmp.eq.s32.totalorder %s12, 1
      %p93 = por %p91, %p92
      %p94 = scmp.ne.s32.totalorder %s86, %s89
      %p95 = scmp.eq.s32.totalorder %s12, 0
      %p96 = por %p94, %p95
      %p97 = scmp.ne.s32.totalorder %s86, %s89
      %p98 = scmp.eq.s32.totalorder %s17, 1
      %p99 = por %p97, %p98
      %p100 = scmp.ne.s32.totalorder %s89, %s90
      %p101 = scmp.eq.s32.totalorder %s17, 0
      %p102 = por %p100, %p101
      %p103 = scmp.ne.s32.totalorder %s89, %s90
      %p104 = scmp.eq.s32.totalorder %s18, 1
      %p105 = por %p103, %p104
      %p107 = scmp.ne.s32.totalorder %s90, %s106
      %p108 = scmp.eq.s32.totalorder %s18, 0
      %p109 = por %p107, %p108
      %s110 = ssub.s32 %s19, %s31
      %p111 = scmp.eq.s32.totalorder %s110, 0
      %s113 = sadd.s32 %s112, 1
      %s114 = scalar_select %p111, %s112, %s113
      %p117 = pneg %p111
      %p118 = scmp.eq.s32.totalorder %s12, 1
      %p119 = por %p117, %p118
      %p120 = scmp.ne.s32.totalorder %s112, %s115
      %p121 = scmp.eq.s32.totalorder %s12, 0
      %p122 = por %p120, %p121
      %p123 = scmp.ne.s32.totalorder %s112, %s115
      %p124 = scmp.eq.s32.totalorder %s17, 1
      %p125 = por %p123, %p124
      %p126 = scmp.ne.s32.totalorder %s115, %s116
      %p127 = scmp.eq.s32.totalorder %s17, 0
      %p128 = por %p126, %p127
      %p129 = scmp.ne.s32.totalorder %s115, %s116
      %p130 = scmp.eq.s32.totalorder %s18, 1
      %p131 = por %p129, %p130
      %p133 = scmp.ne.s32.totalorder %s116, %s132
      %p134 = scmp.eq.s32.totalorder %s18, 0
      %p135 = por %p133, %p134
      %s136 = ssub.s32 %s20, %s27
      %p137 = scmp.eq.s32.totalorder %s136, 0
      %s139 = sadd.s32 %s138, 1
      %s140 = scalar_select %p137, %s138, %s139
      %p143 = pneg %p137
      %p144 = scmp.eq.s32.totalorder %s12, 1
      %p145 = por %p143, %p144
      %p146 = scmp.ne.s32.totalorder %s138, %s141
      %p147 = scmp.eq.s32.totalorder %s12, 0
      %p148 = por %p146, %p147
      %p149 = scmp.ne.s32.totalorder %s138, %s141
      %p150 = scmp.eq.s32.totalorder %s17, 1
      %p151 = por %p149, %p150
      %p152 = scmp.ne.s32.totalorder %s141, %s142
      %p153 = scmp.eq.s32.totalorder %s17, 0
      %p154 = por %p152, %p153
      %p155 = scmp.ne.s32.totalorder %s141, %s142
      %p156 = scmp.eq.s32.totalorder %s18, 1
      %p157 = por %p155, %p156
      %p159 = scmp.ne.s32.totalorder %s142, %s158
      %p160 = scmp.eq.s32.totalorder %s18, 0
      %p161 = por %p159, %p160
      %s162 = ssub.s32 %s19, %s31
      %p163 = scmp.eq.s32.totalorder %s162, 0
      %s165 = sadd.s32 %s164, 1
      %s166 = scalar_select %p163, %s164, %s165
      %p169 = pneg %p163
      %p170 = scmp.eq.s32.totalorder %s12, 1
      %p171 = por %p169, %p170
      %p172 = scmp.ne.s32.totalorder %s164, %s167
      %p173 = scmp.eq.s32.totalorder %s12, 0
      %p174 = por %p172, %p173
      %p175 = scmp.ne.s32.totalorder %s164, %s167
      %p176 = scmp.eq.s32.totalorder %s17, 1
      %p177 = por %p175, %p176
      %p178 = scmp.ne.s32.totalorder %s167, %s168
      %p179 = scmp.eq.s32.totalorder %s17, 0
      %p180 = por %p178, %p179
      %p181 = scmp.ne.s32.totalorder %s167, %s168
      %p182 = scmp.eq.s32.totalorder %s18, 1
      %p183 = por %p181, %p182
      %p185 = scmp.ne.s32.totalorder %s168, %s184
      %p186 = scmp.eq.s32.totalorder %s18, 0
      %p187 = por %p185, %p186
      %p188 = scmp.le.s32.totalorder 1, %s12
      %p189 = scmp.lt.s32.totalorder %s12, 3
      %p190 = pnand %p188, %p189
      %p191 = pneg %p190
      // Predicated region
      $region9: #{tpu_custom_call.1} parent=5 // pred_check
        _
      $region10: #{tpu_custom_call.1} parent=5 // pred_check_branch
        %193 = sbr.rel (%p190) target = $region12
      $region11: #{tpu_custom_call.1} parent=5 // pred_region
        %s194 = ssub.s32 %s12, 1
        // Predicated region
        $region13: #{tpu_custom_call.1} parent=11 // pred_check
          %p195 = pneg %p76
        $region14: #{tpu_custom_call.1} parent=11 // pred_check_branch
          %197 = sbr.rel (%p195) target = $region16
        $region15: #{tpu_custom_call.1} parent=11 // pred_region
          %p198 = scmp.lt.s32.totalorder %s22, 0
          %s199 = scalar_select %p198, %s22, 0
          %s200 = scalar_lea.vmem %s1, %s199
        $region16: #{tpu_custom_call.1} parent=11 // pred_fallthru
          _
        // Predicated region
        $region17: #{tpu_custom_call.1} parent=11 // pred_check
          %p201 = pneg %p154
        $region18: #{tpu_custom_call.1} parent=11 // pred_check_branch
          %203 = sbr.rel (%p201) target = $region20
        $region19: #{tpu_custom_call.1} parent=11 // pred_region
          %s204 = smul.u32 16, %s22
          %s206 = ssub.s32 2048, 2048
          %207 = vsyncadd [#allocation6], %s206
          %s208 = smul.addr %s204, 128
          %s209 = scalar_lea.hbm %s4, %s208
          %s210 = sshll.u32 [#allocation5], 4
          %s211 = int_to_ptr.vmem [resolvable:$true] %s210
          %216 = dma.hbm_to_vmem [thread:$0]  %s209, 2048, %s211, [#allocation6], 128, 128, 8
        $region20: #{tpu_custom_call.1} parent=11 // pred_fallthru
          _
      $region12: #{tpu_custom_call.1} parent=5 // pred_fallthru
        _
      %p217 = scmp.lt.s32.totalorder %s12, 2
      // Predicated region
      $region21: #{tpu_custom_call.1} parent=5 // pred_check
        %p218 = pneg %p217
      $region22: #{tpu_custom_call.1} parent=5 // pred_check_branch
        %220 = sbr.rel (%p218) target = $region24
      $region23: #{tpu_custom_call.1} parent=5 // pred_region
        // Predicated region
        $region25: #{tpu_custom_call.1} parent=23 // pred_check
          %p221 = pneg %p44
        $region26: #{tpu_custom_call.1} parent=23 // pred_check_branch
          %223 = sbr.rel (%p221) target = $region28
        $region27: #{tpu_custom_call.1} parent=23 // pred_region
          %p224 = scmp.lt.s32.totalorder %s19, 1
          %s225 = scalar_select %p224, %s19, 1
          %s226 = smul.addr %s225, 8
          %s227 = scalar_lea.vmem %s0, %s226
        $region28: #{tpu_custom_call.1} parent=23 // pred_fallthru
          _
        // Predicated region
        $region29: #{tpu_custom_call.1} parent=23 // pred_check
          %p228 = pneg %p96
        $region30: #{tpu_custom_call.1} parent=23 // pred_check_branch
          %230 = sbr.rel (%p228) target = $region32
        $region31: #{tpu_custom_call.1} parent=23 // pred_region
          %p231 = scmp.lt.s32.totalorder %s19, 1
          %s232 = scalar_select %p231, %s19, 1
          %s233 = smul.addr %s232, 8
          %s234 = scalar_lea.vmem %s2, %s233
        $region32: #{tpu_custom_call.1} parent=23 // pred_fallthru
          _
        // Predicated region
        $region33: #{tpu_custom_call.1} parent=23 // pred_check
          %p235 = pneg %p122
        $region34: #{tpu_custom_call.1} parent=23 // pred_check_branch
          %237 = sbr.rel (%p235) target = $region36
        $region35: #{tpu_custom_call.1} parent=23 // pred_region
          %p238 = scmp.lt.s32.totalorder %s19, 1
          %s239 = scalar_select %p238, %s19, 1
          %s240 = smul.addr %s239, 8
          %s241 = scalar_lea.vmem %s3, %s240
        $region36: #{tpu_custom_call.1} parent=23 // pred_fallthru
          _
      $region24: #{tpu_custom_call.1} parent=5 // pred_fallthru
        _
      %p242 = scmp.le.s32.totalorder 1, %s12
      %p243 = scmp.lt.s32.totalorder %s12, 3
      %p244 = pnand %p242, %p243
      %p245 = pneg %p244
      // Predicated region
      $region37: #{tpu_custom_call.1} parent=5 // pred_check
        _
      $region38: #{tpu_custom_call.1} parent=5 // pred_check_branch
        %247 = sbr.rel (%p244) target = $region40
      $region39: #{tpu_custom_call.1} parent=5 // pred_region
        %s248 = ssub.s32 %s12, 1
        // Predicated region
        $region41: #{tpu_custom_call.1} parent=39 // pred_check
          %p249 = pneg %p154
        $region42: #{tpu_custom_call.1} parent=39 // pred_check_branch
          %251 = sbr.rel (%p249) target = $region44
        $region43: #{tpu_custom_call.1} parent=39 // pred_region
          %252 = dma.done [#allocation6], 2048
        $region44: #{tpu_custom_call.1} parent=39 // pred_fallthru
          _
        %p253 = scmp.lt.s32.totalorder %s21, 1
        %s254 = scalar_select %p253, %s21, 1
        %s255 = smul.addr %s254, 8
        %s256 = scalar_lea.vmem %s0, %s255
        %p257 = pneg %p50
        %p258 = pneg %p47
        %p259 = scmp.lt.s32.totalorder %s22, 0
        %s260 = scalar_select %p259, %s22, 0
        %s261 = scalar_lea.vmem %s1, %s260
        %p262 = pneg %p76
        %p263 = pneg %p73
        %p264 = scmp.lt.s32.totalorder %s21, 1
        %s265 = scalar_select %p264, %s21, 1
        %s266 = smul.addr %s265, 8
        %s267 = scalar_lea.vmem %s2, %s266
        %p268 = pneg %p102
        %p269 = pneg %p99
        %p270 = scmp.lt.s32.totalorder %s21, 1
        %s271 = scalar_select %p270, %s21, 1
        %s272 = smul.addr %s271, 8
        %s273 = scalar_lea.vmem %s3, %s272
        %p274 = pneg %p128
        %p275 = pneg %p125
        %p276 = pneg %p154
        %p277 = pneg %p151
        %p278 = pneg %p180
        %p279 = pneg %p177
        %p280 = scmp.lt.s32.totalorder %s21, 1
        %s281 = scalar_select %p280, %s21, 1
        %s282 = smul.addr %s281, 8
        %s283 = scalar_lea.vmem %s5, %s282
        %p284 = scmp.lt.s32.totalorder %s21, 1
        %s285 = scalar_select %p284, %s21, 1
        %s286 = smul.addr %s285, 8
        %s287 = scalar_lea.vmem %s0, %s286
        %p288 = scmp.lt.s32.totalorder %s22, 0
        %s289 = scalar_select %p288, %s22, 0
        %s290 = scalar_lea.vmem %s1, %s289
        %p291 = scmp.lt.s32.totalorder %s21, 1
        %s292 = scalar_select %p291, %s21, 1
        %s293 = smul.addr %s292, 8
        %s294 = scalar_lea.vmem %s2, %s293
        %p295 = scmp.lt.s32.totalorder %s21, 1
        %s296 = scalar_select %p295, %s21, 1
        %s297 = smul.addr %s296, 8
        %s298 = scalar_lea.vmem %s3, %s297
        %s299 = smul.u32 16, %s22
        %p300 = scmp.lt.s32.totalorder %s21, 1
        %s301 = scalar_select %p300, %s21, 1
        %s302 = smul.addr %s301, 8
        %s303 = scalar_lea.vmem %s5, %s302
        %p304 = scmp.eq.s32.totalorder %s22, 0
        // Predicated region
        $region45: #{tpu_custom_call.1} parent=39 // pred_check
          %p305 = pneg %p304
        $region46: #{tpu_custom_call.1} parent=39 // pred_check_branch
          %307 = sbr.rel (%p305) target = $region48
        $region47: #{tpu_custom_call.1} parent=39 // pred_region
          %vm308 = vcmask 7168
          %309 = vst.msk [vmem:[#allocation2] sm:$0xff] %vm308, -1e+30
          %310 = vst.msk [vmem:[#allocation3] sm:$0xff] %vm308, 0.0
          %311 = vst.msk [vmem:[#allocation4] sm:$0xff] %vm308, 0.0
        $region48: #{tpu_custom_call.1} parent=39 // pred_fallthru
          _
        %v312 = vld [vmem:[%s298] sm:$0xff]
        %v313 = vld [vmem:[#allocation5] sm:$0xff]
        %v314 = vld [vmem:[#allocation5 + $0x8] sm:$0xff]
        %v315 = vld [vmem:[#allocation5 + $0x10] sm:$0xff]
        %v316 = vld [vmem:[#allocation5 + $0x18] sm:$0xff]
        %v317 = vld [vmem:[#allocation5 + $0x20] sm:$0xff]
        %v318 = vld [vmem:[#allocation5 + $0x28] sm:$0xff]
        %v319 = vld [vmem:[#allocation5 + $0x30] sm:$0xff]
        %v320 = vld [vmem:[#allocation5 + $0x38] sm:$0xff]
        %v321 = vld [vmem:[#allocation5 + $0x40] sm:$0xff]
        %v322 = vld [vmem:[#allocation5 + $0x48] sm:$0xff]
        %v323 = vld [vmem:[#allocation5 + $0x50] sm:$0xff]
        %v324 = vld [vmem:[#allocation5 + $0x58] sm:$0xff]
        %v325 = vld [vmem:[#allocation5 + $0x60] sm:$0xff]
        %v326 = vld [vmem:[#allocation5 + $0x68] sm:$0xff]
        %v327 = vld [vmem:[#allocation5 + $0x70] sm:$0xff]
        %v328 = vld [vmem:[#allocation5 + $0x78] sm:$0xff]
        %329 = vmatprep.subr.mxu0 0.0
        %330 = vmatpush1.xpose.msra.mxu0 %v313
        %331 = vmatprep.subr.mxu0 0.0
        %332 = vmatpush1.xpose.msra.mxu0 %v314
        %333 = vmatprep.subr.mxu0 0.0
        %334 = vmatpush1.xpose.msra.mxu0 %v315
        %335 = vmatprep.subr.mxu0 0.0
        %336 = vmatpush1.xpose.msra.mxu0 %v316
        %337 = vmatprep.subr.mxu0 0.0
        %338 = vmatpush1.xpose.msra.mxu0 %v317
        %339 = vmatprep.subr.mxu0 0.0
        %340 = vmatpush1.xpose.msra.mxu0 %v318
        %341 = vmatprep.subr.mxu0 0.0
        %342 = vmatpush1.xpose.msra.mxu0 %v319
        %343 = vmatprep.subr.mxu0 0.0
        %344 = vmatpush1.xpose.msra.mxu0 %v320
        %345 = vmatprep.subr.mxu0 0.0
        %346 = vmatpush1.xpose.msra.mxu0 %v321
        %347 = vmatprep.subr.mxu0 0.0
        %348 = vmatpush1.xpose.msra.mxu0 %v322
        %349 = vmatprep.subr.mxu0 0.0
        %350 = vmatpush1.xpose.msra.mxu0 %v323
        %351 = vmatprep.subr.mxu0 0.0
        %352 = vmatpush1.xpose.msra.mxu0 %v324
        %353 = vmatprep.subr.mxu0 0.0
        %354 = vmatpush1.xpose.msra.mxu0 %v325
        %355 = vmatprep.subr.mxu0 0.0
        %356 = vmatpush1.xpose.msra.mxu0 %v326
        %357 = vmatprep.subr.mxu0 0.0
        %358 = vmatpush1.xpose.msra.mxu0 %v327
        %359 = vmatprep.subr.mxu0 0.0
        %360 = vmatpush1.xpose.msra.mxu0 %v328
        %361 = vmatprep.subr.mxu0 0.0
        %362 = vmatpush1.xpose.msra.mxu0 0.0
        %363 = vmatprep.subr.mxu0 0.0
        %364 = vmatpush1.xpose.msra.mxu0 0.0
        %365 = vmatprep.subr.mxu0 0.0
        %366 = vmatpush1.xpose.msra.mxu0 0.0
        %367 = vmatprep.subr.mxu0 0.0
        %368 = vmatpush1.xpose.msra.mxu0 0.0
        %369 = vmatprep.subr.mxu0 0.0
        %370 = vmatpush1.xpose.msra.mxu0 0.0
        %371 = vmatprep.subr.mxu0 0.0
        %372 = vmatpush1.xpose.msra.mxu0 0.0
        %373 = vmatprep.subr.mxu0 0.0
        %374 = vmatpush1.xpose.msra.mxu0 0.0
        %375 = vmatprep.subr.mxu0 0.0
        %376 = vmatpush1.xpose.msra.mxu0 0.0
        %377 = vmatprep.subr.mxu0 0.0
        %378 = vmatpush1.xpose.msra.mxu0 0.0
        %379 = vmatprep.subr.mxu0 0.0
        %380 = vmatpush1.xpose.msra.mxu0 0.0
        %381 = vmatprep.subr.mxu0 0.0
        %382 = vmatpush1.xpose.msra.mxu0 0.0
        %383 = vmatprep.subr.mxu0 0.0
        %384 = vmatpush1.xpose.msra.mxu0 0.0
        %385 = vmatprep.subr.mxu0 0.0
        %386 = vmatpush1.xpose.msra.mxu0 0.0
        %387 = vmatprep.subr.mxu0 0.0
        %388 = vmatpush1.xpose.msra.mxu0 0.0
        %389 = vmatprep.subr.mxu0 0.0
        %390 = vmatpush1.xpose.msra.mxu0 0.0
        %391 = vmatprep.subr.mxu0 0.0
        %392 = vmatpush1.xpose.msra.mxu0 0.0
        %393 = vmatprep.mubr.f32.mxu0 0.0
        %394 = vmatmul.mubr.f32.gmra.mrb[0].mxu0 %v312
        %v395 = vpop.f32.mrb[0].mxu0
        %v396 = vadd.f32 0.0, %v395
        %v397 = vpop.f32.mrb[0].mxu0
        %398 = vdwg.mxu0
        %v399 = vmul.f32 %v396, 14.285714
        %v400 = vmax.f32 %v396, -1.0
        %v401 = vmin.f32 %v400, 1.0
        %v402 = vmul.f32 %v401, -141.25519
        %v403 = vmul.f32 %v401, %v401
        %v404 = vsub.f32 1.0, %v403
        %v405 = vmax.f32 %v404, 0.0
        %v406 = vrsqrt.pop %v405
        %v407 = vmul.f32 %v405, %v406
        %vm408 = vcmp.eq.f32.partialorder %v405, inf
        %v409 = vsel %vm408, %v405, %v407
        %vm410 = vcmp.eq.f32.partialorder %v405, 0.0
        %v411 = vand.u32 %v405, 2147483648
        %v412 = vsel %vm410, %v411, %v409
        %v413 = vmul.f32 %v412, 21.333849
        %v414 = vadd.f32 %v402, %v413
        %v415 = vld [vmem:[%s287] sm:$0xff]
        %v416 = vld [vmem:[%s290] sm:$0x1]
        %417 = vset.pattern.permute.xlu0 0
        %418 = vperm.xlu0 %417, %v415
        %v419 = vpop.permute.xlu0 %418
        %v420 = vlaneseq
        %v421 = vshrl.u32 %v420, 7
        %v422 = vsub.s32 0, %v421
        %v423 = vrot.slane %v416, %v422
        %vm424 = vcmp.eq.s32.totalorder %v419, %v423
        %s425 = smul.u32 %s21, 8
        %v426 = vlaneseq
        %v427 = vshrl.u32 %v426, 7
        %v428 = vstv %s425
        %v429 = vadd.s32 %v428, %v427
        %s430 = smul.u32 %s22, 128
        %v431 = vlaneseq
        %v432 = vand.u32 %v431, 127
        %v433 = vstv %s430
        %v434 = vadd.s32 %v433, %v432
        %vm435 = vcmp.ne.s32.totalorder %v429, %v434
        %vm436 = vcmp.lt.s32.totalorder %v434, 16
        %v437 = vsel %vm436, 1, 0
        %vm438 = vcmp.eq.s32.totalorder %v437, 1
        %vm439 = vmand %vm435, %vm438
        %vm440 = vmand %vm424, %vm439
        %v441 = vsel %vm424, %v399, %v414
        %v442 = vsel %vm439, %v441, -1e+30
        %v443 = vld [vmem:[#allocation2] sm:$0xff]
        %444 = vmax.xlane.f32.xlu0 %v442
        %v445 = vpop.xlane.xlu0 %444
        %v446 = vmax.f32 %v443, %v445
        %v447 = vsub.f32 %v443, %v446
        %v448 = vmul.f32 %v447, 1.442695
        %v449 = vpow.pop %v448
        %451 = vset.pattern.permute.xlu0 0
        %452 = vperm.xlu0 %451, %v446
        %v453 = vpop.permute.xlu0 %452
        %v455 = vsub.f32 %v442, %v453
        %v456 = vmul.f32 %v455, 1.442695
        %v457 = vpow.pop %v456
        %v458 = vld [vmem:[#allocation3] sm:$0xff]
        %v459 = vmul.f32 %v449, %v458
        %460 = vadd.xlane.f32.xlu0 %v457
        %v461 = vpop.xlane.xlu0 %460
        %v462 = vadd.f32 %v459, %v461
        %vm463 = vcmask 7168
        %464 = vst.msk [vmem:[#allocation3] sm:$0xff] %vm463, %v462
        %465 = vst.msk [vmem:[#allocation2] sm:$0xff] %vm463, %v446
        %v466 = vld [vmem:[#allocation4] sm:$0xff]
        %v467 = vsel %vm440, %v442, 0.0
        %468 = vadd.xlane.f32.xlu0 %v467
        %v469 = vpop.xlane.xlu0 %468
        %v470 = vadd.f32 %v466, %v469
        %471 = vst.msk [vmem:[#allocation4] sm:$0xff] %vm463, %v470
        // Predicated region
        $region49: #{tpu_custom_call.1} parent=39 // pred_check
          %p472 = pneg %p304
        $region50: #{tpu_custom_call.1} parent=39 // pred_check_branch
          %474 = sbr.rel (%p472) target = $region52
        $region51: #{tpu_custom_call.1} parent=39 // pred_region
          %v475 = vld [vmem:[#allocation2] sm:$0xff]
          %v476 = vld [vmem:[#allocation3] sm:$0xff]
          %v477 = vlog2.pop %v476
          %v478 = vmul.f32 %v477, 0.6931472
          %v479 = vadd.f32 %v475, %v478
          %v480 = vld [vmem:[#allocation4] sm:$0xff]
          %v481 = vld [vmem:[%s294] sm:$0xff]
          %v482 = vrcp.pop %v481
          %v483 = vmul.f32 %v480, %v482
          %v484 = vsub.f32 %v479, %v483
          %485 = vst.msk [vmem:[%s303] sm:$0xff] %vm463, %v484
        $region52: #{tpu_custom_call.1} parent=39 // pred_fallthru
          _
        %p486 = scmp.lt.s32.totalorder %s21, 1
        %s487 = scalar_select %p486, %s21, 1
        %s488 = smul.addr %s487, 8
        %s489 = scalar_lea.vmem %s5, %s488
        // Predicated region
        $region53: #{tpu_custom_call.1} parent=39 // pred_check
          %p490 = pneg %p177
        $region54: #{tpu_custom_call.1} parent=39 // pred_check_branch
          %492 = sbr.rel (%p490) target = $region56
        $region55: #{tpu_custom_call.1} parent=39 // pred_region
          _
        $region56: #{tpu_custom_call.1} parent=39 // pred_fallthru
          _
      $region40: #{tpu_custom_call.1} parent=5 // pred_fallthru
        _
      %p493 = scmp.le.s32.totalorder 2, %s12
      // Predicated region
      $region57: #{tpu_custom_call.1} parent=5 // pred_check
        %p494 = pneg %p493
      $region58: #{tpu_custom_call.1} parent=5 // pred_check_branch
        %496 = sbr.rel (%p494) target = $region60
      $region59: #{tpu_custom_call.1} parent=5 // pred_region
        %s497 = ssub.s32 %s12, 2
        // Predicated region
        $region61: #{tpu_custom_call.1} parent=59 // pred_check
          %p498 = pneg %p183
        $region62: #{tpu_custom_call.1} parent=59 // pred_check_branch
          %500 = sbr.rel (%p498) target = $region64
        $region63: #{tpu_custom_call.1} parent=59 // pred_region
          %p501 = scmp.lt.s32.totalorder %s23, 1
          %s502 = scalar_select %p501, %s23, 1
          %s503 = smul.addr %s502, 8
          %s504 = scalar_lea.vmem %s5, %s503
        $region64: #{tpu_custom_call.1} parent=59 // pred_fallthru
          _
      $region60: #{tpu_custom_call.1} parent=5 // pred_fallthru
        _
    $region6: #{tpu_custom_call.1} parent=1 // loop_footer
      %s16 = sadd.s32 1, %s12
    $region7: #{tpu_custom_call.1} parent=1 // loop_footer_branch
      %11 = sbr.rel target = $region3
    $region8: #{tpu_custom_call.1} parent=1 // loop_exit
      _
    %505 = vsyncpa [#allocation6], 1
    %s506 = scalar_lea.sflag [#allocation6], 1
    %507 = vsyncpa %s506, 1

</llo_original>
